<compile_context>
chip_gen: v6e
topology: v6e:2x2x1
jax: 0.10.0
libtpu: 0.0.40
codegen_flags: <defaults>
</compile_context>

<pallas_src>
import jax
import jax.numpy as jnp
from jax.experimental import pallas as pl
from jax.experimental.pallas import tpu as pltpu

LANE = 128
SUBLANE = 8


def mlp_kernel(x_ref, w1_ref, b1_ref, w2_ref, b2_ref, w3_ref, b3_ref, o_ref):
    # Entire 3-layer MLP fused in one kernel; weights stay resident in VMEM.
    wdt = w1_ref.dtype  # weights may be bf16; accumulation is always fp32.
    x = x_ref[...].astype(wdt)
    h1 = jnp.dot(x, w1_ref[...], preferred_element_type=jnp.float32) + b1_ref[...]
    h1 = jnp.maximum(h1, 0.0)                                   # ReLU (fp32, VPU)
    h2 = jnp.dot(h1.astype(wdt), w2_ref[...],
                 preferred_element_type=jnp.float32) + b2_ref[...]
    h2 = jnp.maximum(h2, 0.0)                                   # ReLU (fp32, VPU)
    out = jnp.dot(h2.astype(wdt), w3_ref[...],
                  preferred_element_type=jnp.float32) + b3_ref[...]
    o_ref[...] = out.astype(o_ref.dtype)


def _round_up(n, m):
    return ((n + m - 1) // m) * m


def _cdiv(a, b):
    return (a + b - 1) // b


def mlp_forward(x, params, *, tile_b=None, weight_dtype=None,
                vmem_budget_bytes=16 * 1024 * 1024):
    """x: [B, inp_dim] float32. params: dict of (w1,b1,w2,b2,w3,b3).

    weight_dtype: optionally cast weights (not biases) to e.g. jnp.bfloat16 —
    fine on v5e/v6e/v7x (bf16-native MXU); accumulation remains fp32.
    """
    B, inp_dim = x.shape
    hid = params["w1"].shape[1]
    out_dim = params["w3"].shape[1]

    # Fold factor: pack F consecutive batch rows into one lane-dense row.
    # Capped at 8 so the block-diagonal weight blowup (F^2) stays tiny.
    F = max(1, min(8, LANE // max(inp_dim, 1)))
    d_in, d_h, d_out = F * inp_dim, F * hid, F * out_dim

    # Block-diagonal weights: the folded layout goes straight through the MXU,
    # no in-kernel relayout.  Extra MXU FLOPs are free under the memory roofline.
    def fold_w(w):
        return jnp.kron(jnp.eye(F, dtype=w.dtype), w) if F > 1 else w

    def fold_b(b):
        return jnp.tile(b, (1, F)) if F > 1 else b

    w1, b1 = fold_w(params["w1"]), fold_b(params["b1"])
    w2, b2 = fold_w(params["w2"]), fold_b(params["b2"])
    w3, b3 = fold_w(params["w3"]), fold_b(params["b3"])
    if weight_dtype is not None:
        w1, w2, w3 = (w.astype(weight_dtype) for w in (w1, w2, w3))

    # ---- batch tile sized against a VMEM budget ----
    ALIGN = F * SUBLANE                      # batch rows per sublane group
    weight_bytes = 4 * (d_in * d_h + d_h * d_h + d_h * d_out + 2 * d_h + d_out)
    budget = max(vmem_budget_bytes - 2 * weight_bytes, 2 * 1024 * 1024)
    # Per folded row: x + out blocks (double-buffered) + h1/h2 intermediates,
    # lane-padded to 128; x1.5 headroom for compiler temporaries.
    bytes_per_frow = 4 * (2 * _round_up(d_in, LANE) + 2 * _round_up(d_out, LANE)
                          + 2 * _round_up(d_h, LANE))
    bytes_per_frow = (bytes_per_frow * 3) // 2
    cap_f = max(SUBLANE, (budget // bytes_per_frow) // SUBLANE * SUBLANE)
    cap_b = cap_f * F

    if tile_b is None:
        n_tiles = max(1, _cdiv(B, cap_b))
        if n_tiles == 1 and B >= 2048:
            n_tiles = 2                      # v7x megacore: feed both TensorCores
        tile_b = _round_up(_cdiv(B, n_tiles), ALIGN)
    else:
        tile_b = _round_up(tile_b, ALIGN)
        n_tiles = _cdiv(B, tile_b)

    B_pad = tile_b * n_tiles                 # pads at most O(ALIGN*n_tiles) rows
    if B_pad != B:
        x = jnp.pad(x, ((0, B_pad - B), (0, 0)))

    xf = x.reshape(B_pad // F, d_in)         # free contiguous reshape (fold)
    tile_f = tile_b // F                     # multiple of 8 by construction

    const_spec = lambda shape: pl.BlockSpec(shape, lambda i: (0, 0))

    outf = pl.pallas_call(
        mlp_kernel,
        out_shape=jax.ShapeDtypeStruct((B_pad // F, d_out), jnp.float32),
        grid_spec=pltpu.PrefetchScalarGridSpec(
            num_scalar_prefetch=0,
            grid=(n_tiles,),
            in_specs=[
                pl.BlockSpec((tile_f, d_in), lambda i: (i, 0)),  # folded x tile
                const_spec((d_in, d_h)),                         # w1 (block-diag)
                const_spec((1, d_h)),                            # b1 (tiled)
                const_spec((d_h, d_h)),                          # w2 (block-diag)
                const_spec((1, d_h)),                            # b2 (tiled)
                const_spec((d_h, d_out)),                        # w3 (block-diag)
                const_spec((1, d_out)),                          # b3 (tiled)
            ],
            out_specs=pl.BlockSpec((tile_f, d_out), lambda i: (i, 0)),
        ),
        compiler_params=pltpu.CompilerParams(
            dimension_semantics=("parallel",),       # megacore sharding on v7x
            vmem_limit_bytes=32 * 1024 * 1024,       # raise v5e's 16 MiB default
        ),
    )(xf, w1, b1, w2, b2, w3, b3)

    # Unfold (free contiguous reshape), drop batch padding.
    return outf.reshape(B_pad, out_dim)[:B]


def init_params(key, inp_dim, hid=32, out_dim=2):
    """Deterministic init mimicking PyTorch Linear: U(-1/sqrt(fan_in), +1/sqrt(fan_in))."""
    keys = jax.random.split(key, 6)

    def linear(kw, kb, fan_in, fan_out):
        bound = 1.0 / jnp.sqrt(fan_in)
        w = jax.random.uniform(kw, (fan_in, fan_out), jnp.float32, -bound, bound)
        b = jax.random.uniform(kb, (1, fan_out), jnp.float32, -bound, bound)
        return w, b

    w1, b1 = linear(keys[0], keys[1], inp_dim, hid)
    w2, b2 = linear(keys[2], keys[3], hid, hid)
    w3, b3 = linear(keys[4], keys[5], hid, out_dim)
    return {"w1": w1, "b1": b1, "w2": w2, "b2": b2, "w3": w3, "b3": b3}


def mlp_reference(x, p):
    h1 = jnp.maximum(x @ p["w1"] + p["b1"], 0.0)
    h2 = jnp.maximum(h1 @ p["w2"] + p["b2"], 0.0)
    return h2 @ p["w3"] + p["b3"]


if __name__ == "__main__":
    key = jax.random.PRNGKey(0)
    k_x, k_p = jax.random.split(key)

    B, inp_dim, hid = 16, 16, 32
    x = jax.random.normal(k_x, (B, inp_dim), dtype=jnp.float32)
    params = init_params(k_p, inp_dim, hid=hid, out_dim=2)

    # Default fp32 path: matches the PyTorch module's numerics.
    out = jax.block_until_ready(mlp_forward(x, params))
    ref = mlp_reference(x, params)
    assert out.shape == (B, 2)
    assert jnp.allclose(out, ref, atol=1e-5, rtol=1e-5)

    # Non-multiple batch exercises the padding path.
    x2 = x[:10]
    out2 = jax.block_until_ready(mlp_forward(x2, params))
    assert out2.shape == (10, 2)
    assert jnp.allclose(out2, mlp_reference(x2, params), atol=1e-5, rtol=1e-5)

    # Larger ragged batch exercises the multi-tile (>= 2 grid-step) path.
    x3 = jax.random.normal(jax.random.PRNGKey(1), (2500, inp_dim), dtype=jnp.float32)
    out3 = jax.block_until_ready(mlp_forward(x3, params))
    assert out3.shape == (2500, 2)
    assert jnp.allclose(out3, mlp_reference(x3, params), atol=2e-5, rtol=2e-5)

    # Mixed-precision weights (bf16 MXU inputs, fp32 accumulation): looser tol.
    out_bf16 = jax.block_until_ready(mlp_forward(x, params, weight_dtype=jnp.bfloat16))
    assert out_bf16.shape == (B, 2)
    assert jnp.allclose(out_bf16, ref, atol=5e-2, rtol=5e-2)

    print("KERNEL_OK")
</pallas_src>

<mosaic_0001>
module attributes {stable_mosaic.version = 11 : i64} {
  func.func @mlp_kernel(%arg0: i32, %arg1: memref<8x128xf32, #tpu.memory_space<vmem>>, %arg2: memref<128x256xf32, #tpu.memory_space<vmem>>, %arg3: memref<1x256xf32, #tpu.memory_space<vmem>>, %arg4: memref<256x256xf32, #tpu.memory_space<vmem>>, %arg5: memref<1x256xf32, #tpu.memory_space<vmem>>, %arg6: memref<256x16xf32, #tpu.memory_space<vmem>>, %arg7: memref<1x16xf32, #tpu.memory_space<vmem>>, %arg8: memref<8x16xf32, #tpu.memory_space<vmem>>) attributes {dimension_semantics = [#tpu.dimension_semantics<parallel>], iteration_bounds = array<i64: 1>, scalar_prefetch = 0 : i64, scratch_operands = 0 : i64, tpu.core_type = #tpu.core_type<tc>, window_params = [{transform_indices = @transform_0, window_bounds = array<i64: 8, 128>}, {pipeline_mode = #tpu.pipeline_mode<synchronous>, transform_indices = @transform_1, window_bounds = array<i64: 128, 256>}, {pipeline_mode = #tpu.pipeline_mode<synchronous>, transform_indices = @transform_2, window_bounds = array<i64: 1, 256>}, {pipeline_mode = #tpu.pipeline_mode<synchronous>, transform_indices = @transform_3, window_bounds = array<i64: 256, 256>}, {pipeline_mode = #tpu.pipeline_mode<synchronous>, transform_indices = @transform_4, window_bounds = array<i64: 1, 256>}, {pipeline_mode = #tpu.pipeline_mode<synchronous>, transform_indices = @transform_5, window_bounds = array<i64: 256, 16>}, {pipeline_mode = #tpu.pipeline_mode<synchronous>, transform_indices = @transform_6, window_bounds = array<i64: 1, 16>}, {transform_indices = @transform_7, window_bounds = array<i64: 8, 16>}]} {
    %c0 = arith.constant 0 : index
    %c0_0 = arith.constant 0 : index
    %0 = vector.load %arg1[%c0, %c0_0] : memref<8x128xf32, #tpu.memory_space<vmem>>, vector<8x128xf32>
    %c0_1 = arith.constant 0 : index
    %c0_2 = arith.constant 0 : index
    %1 = vector.load %arg2[%c0_1, %c0_2] : memref<128x256xf32, #tpu.memory_space<vmem>>, vector<128x256xf32>
    %cst = arith.constant dense<0.000000e+00> : vector<8x256xf32>
    %2 = tpu.matmul %0, %1, %cst {dimension_numbers = #tpu.dot_dimension_numbers<[1], [0], [0], [1], [0, 0, 1, 1], [], []>} : vector<8x128xf32>, vector<128x256xf32>, vector<8x256xf32> -> vector<8x256xf32>
    %c0_3 = arith.constant 0 : index
    %c0_4 = arith.constant 0 : index
    %3 = vector.load %arg3[%c0_3, %c0_4] : memref<1x256xf32, #tpu.memory_space<vmem>>, vector<1x256xf32>
    %4 = vector.broadcast %3 : vector<1x256xf32> to vector<8x256xf32>
    %5 = arith.addf %2, %4 : vector<8x256xf32>
    %cst_5 = arith.constant 0.000000e+00 : f32
    %6 = vector.broadcast %cst_5 : f32 to vector<8x256xf32>
    %7 = arith.maximumf %5, %6 : vector<8x256xf32>
    %c0_6 = arith.constant 0 : index
    %c0_7 = arith.constant 0 : index
    %8 = vector.load %arg4[%c0_6, %c0_7] : memref<256x256xf32, #tpu.memory_space<vmem>>, vector<256x256xf32>
    %cst_8 = arith.constant dense<0.000000e+00> : vector<8x256xf32>
    %9 = tpu.matmul %7, %8, %cst_8 {dimension_numbers = #tpu.dot_dimension_numbers<[1], [0], [0], [1], [0, 0, 1, 1], [], []>} : vector<8x256xf32>, vector<256x256xf32>, vector<8x256xf32> -> vector<8x256xf32>
    %c0_9 = arith.constant 0 : index
    %c0_10 = arith.constant 0 : index
    %10 = vector.load %arg5[%c0_9, %c0_10] : memref<1x256xf32, #tpu.memory_space<vmem>>, vector<1x256xf32>
    %11 = vector.broadcast %10 : vector<1x256xf32> to vector<8x256xf32>
    %12 = arith.addf %9, %11 : vector<8x256xf32>
    %cst_11 = arith.constant 0.000000e+00 : f32
    %13 = vector.broadcast %cst_11 : f32 to vector<8x256xf32>
    %14 = arith.maximumf %12, %13 : vector<8x256xf32>
    %c0_12 = arith.constant 0 : index
    %c0_13 = arith.constant 0 : index
    %15 = vector.load %arg6[%c0_12, %c0_13] : memref<256x16xf32, #tpu.memory_space<vmem>>, vector<256x16xf32>
    %cst_14 = arith.constant dense<0.000000e+00> : vector<8x16xf32>
    %16 = tpu.matmul %14, %15, %cst_14 {dimension_numbers = #tpu.dot_dimension_numbers<[1], [0], [0], [1], [0, 0, 1, 1], [], []>} : vector<8x256xf32>, vector<256x16xf32>, vector<8x16xf32> -> vector<8x16xf32>
    %c0_15 = arith.constant 0 : index
    %c0_16 = arith.constant 0 : index
    %17 = vector.load %arg7[%c0_15, %c0_16] : memref<1x16xf32, #tpu.memory_space<vmem>>, vector<1x16xf32>
    %18 = vector.broadcast %17 : vector<1x16xf32> to vector<8x16xf32>
    %19 = arith.addf %16, %18 : vector<8x16xf32>
    %c0_17 = arith.constant 0 : index
    %c0_18 = arith.constant 0 : index
    %20 = vector.load %arg8[%c0_17, %c0_18] : memref<8x16xf32, #tpu.memory_space<vmem>>, vector<8x16xf32>
    tpu.vector_store %arg8[%c0_17, %c0_18], %19 {strides = array<i32>} : memref<8x16xf32, #tpu.memory_space<vmem>>, vector<8x16xf32>,
    return
  }
  func.func @transform_0(%arg0: i32) -> (i32, i32) {
    %c0_i32 = arith.constant 0 : i32
    %c0_i32_0 = arith.constant 0 : i32
    return %arg0, %c0_i32 : i32, i32
  }
  func.func @transform_1(%arg0: i32) -> (i32, i32) {
    %c0_i32 = arith.constant 0 : i32
    %c0_i32_0 = arith.constant 0 : i32
    %c0_i32_1 = arith.constant 0 : i32
    return %c0_i32, %c0_i32_0 : i32, i32
  }
  func.func @transform_2(%arg0: i32) -> (i32, i32) {
    %c0_i32 = arith.constant 0 : i32
    %c0_i32_0 = arith.constant 0 : i32
    %c0_i32_1 = arith.constant 0 : i32
    return %c0_i32, %c0_i32_0 : i32, i32
  }
  func.func @transform_3(%arg0: i32) -> (i32, i32) {
    %c0_i32 = arith.constant 0 : i32
    %c0_i32_0 = arith.constant 0 : i32
    %c0_i32_1 = arith.constant 0 : i32
    return %c0_i32, %c0_i32_0 : i32, i32
  }
  func.func @transform_4(%arg0: i32) -> (i32, i32) {
    %c0_i32 = arith.constant 0 : i32
    %c0_i32_0 = arith.constant 0 : i32
    %c0_i32_1 = arith.constant 0 : i32
    return %c0_i32, %c0_i32_0 : i32, i32
  }
  func.func @transform_5(%arg0: i32) -> (i32, i32) {
    %c0_i32 = arith.constant 0 : i32
    %c0_i32_0 = arith.constant 0 : i32
    %c0_i32_1 = arith.constant 0 : i32
    return %c0_i32, %c0_i32_0 : i32, i32
  }
  func.func @transform_6(%arg0: i32) -> (i32, i32) {
    %c0_i32 = arith.constant 0 : i32
    %c0_i32_0 = arith.constant 0 : i32
    %c0_i32_1 = arith.constant 0 : i32
    return %c0_i32, %c0_i32_0 : i32, i32
  }
  func.func @transform_7(%arg0: i32) -> (i32, i32) {
    %c0_i32 = arith.constant 0 : i32
    %c0_i32_0 = arith.constant 0 : i32
    return %arg0, %c0_i32 : i32, i32
  }
}

</mosaic_0001>

<llo_original>
// kernel: tpu_custom_call.1
$region0: #{tpu_custom_call.1}
  #allocation0 [shape = 'u32[]', space=smem, size = 0x4, offset = 0x4, fixed_abs, tag = 'smem constant byte address 0x4 - core index']
  #allocation1 [shape = 'u32[144,128]{1,0:T(1,128)}', space=vmem, size = 0x12000, scoped, tag = 'internal scratch']
  %s0 = inlined_call_operand.vmem [shape: f32[8,128], index: 0, kind: input, shape index: {}]
  %s1 = inlined_call_operand.vmem [shape: f32[128,256], index: 1, kind: input, shape index: {}]
  %s2 = inlined_call_operand.vmem [shape: f32[1,256], index: 2, kind: input, shape index: {}]
  %s3 = inlined_call_operand.hbm [shape: f32[256,256], index: 3, kind: input, shape index: {}]
  %s4 = inlined_call_operand.vmem [shape: f32[1,256], index: 4, kind: input, shape index: {}]
  %s5 = inlined_call_operand.vmem [shape: f32[256,16], index: 5, kind: input, shape index: {}]
  %s6 = inlined_call_operand.vmem [shape: f32[1,16], index: 6, kind: input, shape index: {}]
  %s7 = inlined_call_operand.hbm [shape: f32[8,16], index: 7, kind: output, shape index: {}]
  %s8 = sld [smem:[#allocation0]]
  $region42: #{tpu_custom_call.1} parent=0
    _
  %s10 = ssub.s32 1, %s8
  %s11 = scalar_select 0, %s10, %s8
  $region1: #{tpu_custom_call.1} parent=0
    #allocation2 [shape = 'u8[262144]{0}', space=vmem, size = 0x40000, scoped, tag = 'input window, operand 3, single buffered']
    #allocation3 [shape = 's32[1]{0}', space=sflag, size = 0x4, scoped, tag = 'scoped memory for tpu_custom_call.1']
    #allocation4 [shape = 's32[1]{0}', space=sflag, size = 0x4, scoped, tag = 'scoped memory for tpu_custom_call.1']
    #allocation5 [shape = 'u8[4096]{0}', space=vmem, size = 0x1000, scoped, tag = 'output window, operand 0, single buffered']
    %12 = vsyncpa [#allocation3], 0
    %13 = vsyncpa [#allocation4], 0
    // Predicated region
    $region2: #{tpu_custom_call.1} parent=1 // pred_check
      _
    $region3: #{tpu_custom_call.1} parent=1 // pred_check_branch
      %15 = sbr.rel (0) target = $region5
    $region4: #{tpu_custom_call.1} parent=1 // pred_region
      _
    $region5: #{tpu_custom_call.1} parent=1 // pred_fallthru
      _
    // Predicated region
    $region6: #{tpu_custom_call.1} parent=1 // pred_check
      _
    $region7: #{tpu_custom_call.1} parent=1 // pred_check_branch
      %17 = sbr.rel (0) target = $region9
    $region8: #{tpu_custom_call.1} parent=1 // pred_region
      _
    $region9: #{tpu_custom_call.1} parent=1 // pred_fallthru
      _
    // Predicated region
    $region10: #{tpu_custom_call.1} parent=1 // pred_check
      _
    $region11: #{tpu_custom_call.1} parent=1 // pred_check_branch
      %19 = sbr.rel (0) target = $region13
    $region12: #{tpu_custom_call.1} parent=1 // pred_region
      _
    $region13: #{tpu_custom_call.1} parent=1 // pred_fallthru
      _
    // Predicated region
    $region14: #{tpu_custom_call.1} parent=1 // pred_check
      _
    $region15: #{tpu_custom_call.1} parent=1 // pred_check_branch
      %21 = sbr.rel (0) target = $region17
    $region16: #{tpu_custom_call.1} parent=1 // pred_region
      %s23 = ssub.s32 8192, 8192
      %24 = vsyncadd [#allocation3], %s23
      %s25 = sshll.u32 [#allocation2], 4
      %s26 = int_to_ptr.vmem [resolvable:$true] %s25
      %31 = dma.hbm_to_vmem [thread:$0]  %s3, 8192, %s26, [#allocation3], 256, 256, 16
    $region17: #{tpu_custom_call.1} parent=1 // pred_fallthru
      _
    // Predicated region
    $region18: #{tpu_custom_call.1} parent=1 // pred_check
      _
    $region19: #{tpu_custom_call.1} parent=1 // pred_check_branch
      %33 = sbr.rel (0) target = $region21
    $region20: #{tpu_custom_call.1} parent=1 // pred_region
      _
    $region21: #{tpu_custom_call.1} parent=1 // pred_fallthru
      _
    // Predicated region
    $region22: #{tpu_custom_call.1} parent=1 // pred_check
      _
    $region23: #{tpu_custom_call.1} parent=1 // pred_check_branch
      %35 = sbr.rel (0) target = $region25
    $region24: #{tpu_custom_call.1} parent=1 // pred_region
      _
    $region25: #{tpu_custom_call.1} parent=1 // pred_fallthru
      _
    // Predicated region
    $region26: #{tpu_custom_call.1} parent=1 // pred_check
      _
    $region27: #{tpu_custom_call.1} parent=1 // pred_check_branch
      %37 = sbr.rel (0) target = $region29
    $region28: #{tpu_custom_call.1} parent=1 // pred_region
      _
    $region29: #{tpu_custom_call.1} parent=1 // pred_fallthru
      _
    // Predicated region
    $region30: #{tpu_custom_call.1} parent=1 // pred_check
      _
    $region31: #{tpu_custom_call.1} parent=1 // pred_check_branch
      %39 = sbr.rel (0) target = $region33
    $region32: #{tpu_custom_call.1} parent=1 // pred_region
      %40 = dma.done [#allocation3], 8192
    $region33: #{tpu_custom_call.1} parent=1 // pred_fallthru
      _
    %v41 = vld [vmem:[%s0] sm:$0xff]
    %v42 = vld [vmem:[%s1] sm:$0xff]
    %v43 = vld [vmem:[%s1 + $0x8] sm:$0xff]
    %v44 = vld [vmem:[%s1 + $0x10] sm:$0xff]
    %v45 = vld [vmem:[%s1 + $0x18] sm:$0xff]
    %v46 = vld [vmem:[%s1 + $0x20] sm:$0xff]
    %v47 = vld [vmem:[%s1 + $0x28] sm:$0xff]
    %v48 = vld [vmem:[%s1 + $0x30] sm:$0xff]
    %v49 = vld [vmem:[%s1 + $0x38] sm:$0xff]
    %v50 = vld [vmem:[%s1 + $0x40] sm:$0xff]
    %v51 = vld [vmem:[%s1 + $0x48] sm:$0xff]
    %v52 = vld [vmem:[%s1 + $0x50] sm:$0xff]
    %v53 = vld [vmem:[%s1 + $0x58] sm:$0xff]
    %v54 = vld [vmem:[%s1 + $0x60] sm:$0xff]
    %v55 = vld [vmem:[%s1 + $0x68] sm:$0xff]
    %v56 = vld [vmem:[%s1 + $0x70] sm:$0xff]
    %v57 = vld [vmem:[%s1 + $0x78] sm:$0xff]
    %v58 = vld [vmem:[%s1 + $0x80] sm:$0xff]
    %v59 = vld [vmem:[%s1 + $0x88] sm:$0xff]
    %v60 = vld [vmem:[%s1 + $0x90] sm:$0xff]
    %v61 = vld [vmem:[%s1 + $0x98] sm:$0xff]
    %v62 = vld [vmem:[%s1 + $0xa0] sm:$0xff]
    %v63 = vld [vmem:[%s1 + $0xa8] sm:$0xff]
    %v64 = vld [vmem:[%s1 + $0xb0] sm:$0xff]
    %v65 = vld [vmem:[%s1 + $0xb8] sm:$0xff]
    %v66 = vld [vmem:[%s1 + $0xc0] sm:$0xff]
    %v67 = vld [vmem:[%s1 + $0xc8] sm:$0xff]
    %v68 = vld [vmem:[%s1 + $0xd0] sm:$0xff]
    %v69 = vld [vmem:[%s1 + $0xd8] sm:$0xff]
    %v70 = vld [vmem:[%s1 + $0xe0] sm:$0xff]
    %v71 = vld [vmem:[%s1 + $0xe8] sm:$0xff]
    %v72 = vld [vmem:[%s1 + $0xf0] sm:$0xff]
    %v73 = vld [vmem:[%s1 + $0xf8] sm:$0xff]
    %v74 = vld [vmem:[%s2] sm:$0x3]
    %v76 = vlaneseq
    %v77 = vshrl.u32 %v76, 7
    %v78 = vsub.s32 0, %v77
    %v79 = vrot.slane %v74, %v78
    %v80 = vlaneseq
    %v81 = vshrl.u32 %v80, 7
    %v82 = vsub.s32 1, %v81
    %v83 = vrot.slane %v74, %v82
    %86 = vmatprep.subr.mxu0 %v73
    %87 = vmatpush1.msra.mxu0 %v72
    %88 = vmatprep.subr.mxu0 %v71
    %89 = vmatpush1.msra.mxu0 %v70
    %90 = vmatprep.subr.mxu0 %v69
    %91 = vmatpush1.msra.mxu0 %v68
    %92 = vmatprep.subr.mxu0 %v67
    %93 = vmatpush1.msra.mxu0 %v66
    %94 = vmatprep.subr.mxu0 %v65
    %95 = vmatpush1.msra.mxu0 %v64
    %96 = vmatprep.subr.mxu0 %v63
    %97 = vmatpush1.msra.mxu0 %v62
    %98 = vmatprep.subr.mxu0 %v61
    %99 = vmatpush1.msra.mxu0 %v60
    %100 = vmatprep.subr.mxu0 %v59
    %101 = vmatpush1.msra.mxu0 %v58
    %102 = vmatprep.subr.mxu0 %v57
    %103 = vmatpush1.msra.mxu0 %v56
    %104 = vmatprep.subr.mxu0 %v55
    %105 = vmatpush1.msra.mxu0 %v54
    %106 = vmatprep.subr.mxu0 %v53
    %107 = vmatpush1.msra.mxu0 %v52
    %108 = vmatprep.subr.mxu0 %v51
    %109 = vmatpush1.msra.mxu0 %v50
    %110 = vmatprep.subr.mxu0 %v49
    %111 = vmatpush1.msra.mxu0 %v48
    %112 = vmatprep.subr.mxu0 %v47
    %113 = vmatpush1.msra.mxu0 %v46
    %114 = vmatprep.subr.mxu0 %v45
    %115 = vmatpush1.msra.mxu0 %v44
    %116 = vmatprep.subr.mxu0 %v43
    %117 = vmatpush1.msra.mxu0 %v42
    %118 = vmatprep.subr.mxu0 0.0
    %119 = vmatpush2.msra.mxu0 0.0
    %120 = vmatprep.subr.mxu0 0.0
    %121 = vmatpush2.msra.mxu0 0.0
    %122 = vmatprep.subr.mxu0 0.0
    %123 = vmatpush2.msra.mxu0 0.0
    %124 = vmatprep.subr.mxu0 0.0
    %125 = vmatpush2.msra.mxu0 0.0
    %126 = vmatprep.subr.mxu0 0.0
    %127 = vmatpush2.msra.mxu0 0.0
    %128 = vmatprep.subr.mxu0 0.0
    %129 = vmatpush2.msra.mxu0 0.0
    %130 = vmatprep.subr.mxu0 0.0
    %131 = vmatpush2.msra.mxu0 0.0
    %132 = vmatprep.subr.mxu0 0.0
    %133 = vmatpush2.msra.mxu0 0.0
    %134 = vmatprep.subr.mxu0 0.0
    %135 = vmatpush2.msra.mxu0 0.0
    %136 = vmatprep.subr.mxu0 0.0
    %137 = vmatpush2.msra.mxu0 0.0
    %138 = vmatprep.subr.mxu0 0.0
    %139 = vmatpush2.msra.mxu0 0.0
    %140 = vmatprep.subr.mxu0 0.0
    %141 = vmatpush2.msra.mxu0 0.0
    %142 = vmatprep.subr.mxu0 0.0
    %143 = vmatpush2.msra.mxu0 0.0
    %144 = vmatprep.subr.mxu0 0.0
    %145 = vmatpush2.msra.mxu0 0.0
    %146 = vmatprep.subr.mxu0 0.0
    %147 = vmatpush2.msra.mxu0 0.0
    %148 = vmatprep.subr.mxu0 0.0
    %149 = vmatpush2.msra.mxu0 0.0
    %150 = vmatprep.mubr.f32.mxu0 0.0
    %151 = vmatmul.mubr.f32.gmra.mxu0 %v41
    %v152 = vpop.f32.mrf.mxu0
    %v153 = vadd.f32 %v79, %v152
    %v154 = vpop.f32.mrf.mxu0
    %v155 = vadd.f32 %v83, %v154
    %156 = vdwg.mxu0
    %v157 = vmax.f32 %v153, 0.0
    %v158 = vmax.f32 %v155, 0.0
    %v159 = vld [vmem:[#allocation2] sm:$0xff]
    %v160 = vld [vmem:[#allocation2 + $0x8] sm:$0xff]
    %v161 = vld [vmem:[#allocation2 + $0x10] sm:$0xff]
    %v162 = vld [vmem:[#allocation2 + $0x18] sm:$0xff]
    %v163 = vld [vmem:[#allocation2 + $0x20] sm:$0xff]
    %v164 = vld [vmem:[#allocation2 + $0x28] sm:$0xff]
    %v165 = vld [vmem:[#allocation2 + $0x30] sm:$0xff]
    %v166 = vld [vmem:[#allocation2 + $0x38] sm:$0xff]
    %v167 = vld [vmem:[#allocation2 + $0x40] sm:$0xff]
    %v168 = vld [vmem:[#allocation2 + $0x48] sm:$0xff]
    %v169 = vld [vmem:[#allocation2 + $0x50] sm:$0xff]
    %v170 = vld [vmem:[#allocation2 + $0x58] sm:$0xff]
    %v171 = vld [vmem:[#allocation2 + $0x60] sm:$0xff]
    %v172 = vld [vmem:[#allocation2 + $0x68] sm:$0xff]
    %v173 = vld [vmem:[#allocation2 + $0x70] sm:$0xff]
    %v174 = vld [vmem:[#allocation2 + $0x78] sm:$0xff]
    %v175 = vld [vmem:[#allocation2 + $0x80] sm:$0xff]
    %v176 = vld [vmem:[#allocation2 + $0x88] sm:$0xff]
    %v177 = vld [vmem:[#allocation2 + $0x90] sm:$0xff]
    %v178 = vld [vmem:[#allocation2 + $0x98] sm:$0xff]
    %v179 = vld [vmem:[#allocation2 + $0xa0] sm:$0xff]
    %v180 = vld [vmem:[#allocation2 + $0xa8] sm:$0xff]
    %v181 = vld [vmem:[#allocation2 + $0xb0] sm:$0xff]
    %v182 = vld [vmem:[#allocation2 + $0xb8] sm:$0xff]
    %v183 = vld [vmem:[#allocation2 + $0xc0] sm:$0xff]
    %v184 = vld [vmem:[#allocation2 + $0xc8] sm:$0xff]
    %v185 = vld [vmem:[#allocation2 + $0xd0] sm:$0xff]
    %v186 = vld [vmem:[#allocation2 + $0xd8] sm:$0xff]
    %v187 = vld [vmem:[#allocation2 + $0xe0] sm:$0xff]
    %v188 = vld [vmem:[#allocation2 + $0xe8] sm:$0xff]
    %v189 = vld [vmem:[#allocation2 + $0xf0] sm:$0xff]
    %v190 = vld [vmem:[#allocation2 + $0xf8] sm:$0xff]
    %v191 = vld [vmem:[#allocation2 + $0x100] sm:$0xff]
    %v192 = vld [vmem:[#allocation2 + $0x108] sm:$0xff]
    %v193 = vld [vmem:[#allocation2 + $0x110] sm:$0xff]
    %v194 = vld [vmem:[#allocation2 + $0x118] sm:$0xff]
    %v195 = vld [vmem:[#allocation2 + $0x120] sm:$0xff]
    %v196 = vld [vmem:[#allocation2 + $0x128] sm:$0xff]
    %v197 = vld [vmem:[#allocation2 + $0x130] sm:$0xff]
    %v198 = vld [vmem:[#allocation2 + $0x138] sm:$0xff]
    %v199 = vld [vmem:[#allocation2 + $0x140] sm:$0xff]
    %v200 = vld [vmem:[#allocation2 + $0x148] sm:$0xff]
    %v201 = vld [vmem:[#allocation2 + $0x150] sm:$0xff]
    %v202 = vld [vmem:[#allocation2 + $0x158] sm:$0xff]
    %v203 = vld [vmem:[#allocation2 + $0x160] sm:$0xff]
    %v204 = vld [vmem:[#allocation2 + $0x168] sm:$0xff]
    %v205 = vld [vmem:[#allocation2 + $0x170] sm:$0xff]
    %v206 = vld [vmem:[#allocation2 + $0x178] sm:$0xff]
    %v207 = vld [vmem:[#allocation2 + $0x180] sm:$0xff]
    %v208 = vld [vmem:[#allocation2 + $0x188] sm:$0xff]
    %v209 = vld [vmem:[#allocation2 + $0x190] sm:$0xff]
    %v210 = vld [vmem:[#allocation2 + $0x198] sm:$0xff]
    %v211 = vld [vmem:[#allocation2 + $0x1a0] sm:$0xff]
    %v212 = vld [vmem:[#allocation2 + $0x1a8] sm:$0xff]
    %v213 = vld [vmem:[#allocation2 + $0x1b0] sm:$0xff]
    %v214 = vld [vmem:[#allocation2 + $0x1b8] sm:$0xff]
    %v215 = vld [vmem:[#allocation2 + $0x1c0] sm:$0xff]
    %v216 = vld [vmem:[#allocation2 + $0x1c8] sm:$0xff]
    %v217 = vld [vmem:[#allocation2 + $0x1d0] sm:$0xff]
    %v218 = vld [vmem:[#allocation2 + $0x1d8] sm:$0xff]
    %v219 = vld [vmem:[#allocation2 + $0x1e0] sm:$0xff]
    %v220 = vld [vmem:[#allocation2 + $0x1e8] sm:$0xff]
    %v221 = vld [vmem:[#allocation2 + $0x1f0] sm:$0xff]
    %v222 = vld [vmem:[#allocation2 + $0x1f8] sm:$0xff]
    %v223 = vld [vmem:[%s4] sm:$0x3]
    %v225 = vlaneseq
    %v226 = vshrl.u32 %v225, 7
    %v227 = vsub.s32 0, %v226
    %v228 = vrot.slane %v223, %v227
    %v229 = vlaneseq
    %v230 = vshrl.u32 %v229, 7
    %v231 = vsub.s32 1, %v230
    %v232 = vrot.slane %v223, %v231
    %235 = vmatprep.subr.mxu0 %v190
    %236 = vmatpush1.msra.mxu0 %v189
    %237 = vmatprep.subr.mxu0 %v188
    %238 = vmatpush1.msra.mxu0 %v187
    %239 = vmatprep.subr.mxu0 %v186
    %240 = vmatpush1.msra.mxu0 %v185
    %241 = vmatprep.subr.mxu0 %v184
    %242 = vmatpush1.msra.mxu0 %v183
    %243 = vmatprep.subr.mxu0 %v182
    %244 = vmatpush1.msra.mxu0 %v181
    %245 = vmatprep.subr.mxu0 %v180
    %246 = vmatpush1.msra.mxu0 %v179
    %247 = vmatprep.subr.mxu0 %v178
    %248 = vmatpush1.msra.mxu0 %v177
    %249 = vmatprep.subr.mxu0 %v176
    %250 = vmatpush1.msra.mxu0 %v175
    %251 = vmatprep.subr.mxu0 %v174
    %252 = vmatpush1.msra.mxu0 %v173
    %253 = vmatprep.subr.mxu0 %v172
    %254 = vmatpush1.msra.mxu0 %v171
    %255 = vmatprep.subr.mxu0 %v170
    %256 = vmatpush1.msra.mxu0 %v169
    %257 = vmatprep.subr.mxu0 %v168
    %258 = vmatpush1.msra.mxu0 %v167
    %259 = vmatprep.subr.mxu0 %v166
    %260 = vmatpush1.msra.mxu0 %v165
    %261 = vmatprep.subr.mxu0 %v164
    %262 = vmatpush1.msra.mxu0 %v163
    %263 = vmatprep.subr.mxu0 %v162
    %264 = vmatpush1.msra.mxu0 %v161
    %265 = vmatprep.subr.mxu0 %v160
    %266 = vmatpush1.msra.mxu0 %v159
    %267 = vmatprep.subr.mxu0 %v222
    %268 = vmatpush2.msra.mxu0 %v221
    %269 = vmatprep.subr.mxu0 %v220
    %270 = vmatpush2.msra.mxu0 %v219
    %271 = vmatprep.subr.mxu0 %v218
    %272 = vmatpush2.msra.mxu0 %v217
    %273 = vmatprep.subr.mxu0 %v216
    %274 = vmatpush2.msra.mxu0 %v215
    %275 = vmatprep.subr.mxu0 %v214
    %276 = vmatpush2.msra.mxu0 %v213
    %277 = vmatprep.subr.mxu0 %v212
    %278 = vmatpush2.msra.mxu0 %v211
    %279 = vmatprep.subr.mxu0 %v210
    %280 = vmatpush2.msra.mxu0 %v209
    %281 = vmatprep.subr.mxu0 %v208
    %282 = vmatpush2.msra.mxu0 %v207
    %283 = vmatprep.subr.mxu0 %v206
    %284 = vmatpush2.msra.mxu0 %v205
    %285 = vmatprep.subr.mxu0 %v204
    %286 = vmatpush2.msra.mxu0 %v203
    %287 = vmatprep.subr.mxu0 %v202
    %288 = vmatpush2.msra.mxu0 %v201
    %289 = vmatprep.subr.mxu0 %v200
    %290 = vmatpush2.msra.mxu0 %v199
    %291 = vmatprep.subr.mxu0 %v198
    %292 = vmatpush2.msra.mxu0 %v197
    %293 = vmatprep.subr.mxu0 %v196
    %294 = vmatpush2.msra.mxu0 %v195
    %295 = vmatprep.subr.mxu0 %v194
    %296 = vmatpush2.msra.mxu0 %v193
    %297 = vmatprep.subr.mxu0 %v192
    %298 = vmatpush2.msra.mxu0 %v191
    %299 = vmatprep.mubr.f32.mxu0 %v158
    %300 = vmatmul.mubr.f32.gmra.mxu0 %v157
    %v301 = vpop.f32.mrf.mxu0
    %v302 = vadd.f32 %v228, %v301
    %v303 = vpop.f32.mrf.mxu0
    %v304 = vadd.f32 %v232, %v303
    %305 = vdwg.mxu0
    %v306 = vmax.f32 %v302, 0.0
    %v307 = vmax.f32 %v304, 0.0
    %v308 = vld [vmem:[%s5] sm:$0xff]
    %v309 = vld [vmem:[%s5 + $0x8] sm:$0xff]
    %v310 = vld [vmem:[%s5 + $0x10] sm:$0xff]
    %v311 = vld [vmem:[%s5 + $0x18] sm:$0xff]
    %v312 = vld [vmem:[%s5 + $0x20] sm:$0xff]
    %v313 = vld [vmem:[%s5 + $0x28] sm:$0xff]
    %v314 = vld [vmem:[%s5 + $0x30] sm:$0xff]
    %v315 = vld [vmem:[%s5 + $0x38] sm:$0xff]
    %v316 = vld [vmem:[%s5 + $0x40] sm:$0xff]
    %v317 = vld [vmem:[%s5 + $0x48] sm:$0xff]
    %v318 = vld [vmem:[%s5 + $0x50] sm:$0xff]
    %v319 = vld [vmem:[%s5 + $0x58] sm:$0xff]
    %v320 = vld [vmem:[%s5 + $0x60] sm:$0xff]
    %v321 = vld [vmem:[%s5 + $0x68] sm:$0xff]
    %v322 = vld [vmem:[%s5 + $0x70] sm:$0xff]
    %v323 = vld [vmem:[%s5 + $0x78] sm:$0xff]
    %v324 = vld [vmem:[%s5 + $0x80] sm:$0xff]
    %v325 = vld [vmem:[%s5 + $0x88] sm:$0xff]
    %v326 = vld [vmem:[%s5 + $0x90] sm:$0xff]
    %v327 = vld [vmem:[%s5 + $0x98] sm:$0xff]
    %v328 = vld [vmem:[%s5 + $0xa0] sm:$0xff]
    %v329 = vld [vmem:[%s5 + $0xa8] sm:$0xff]
    %v330 = vld [vmem:[%s5 + $0xb0] sm:$0xff]
    %v331 = vld [vmem:[%s5 + $0xb8] sm:$0xff]
    %v332 = vld [vmem:[%s5 + $0xc0] sm:$0xff]
    %v333 = vld [vmem:[%s5 + $0xc8] sm:$0xff]
    %v334 = vld [vmem:[%s5 + $0xd0] sm:$0xff]
    %v335 = vld [vmem:[%s5 + $0xd8] sm:$0xff]
    %v336 = vld [vmem:[%s5 + $0xe0] sm:$0xff]
    %v337 = vld [vmem:[%s5 + $0xe8] sm:$0xff]
    %v338 = vld [vmem:[%s5 + $0xf0] sm:$0xff]
    %v339 = vld [vmem:[%s5 + $0xf8] sm:$0xff]
    %v340 = vld [vmem:[%s6] sm:$0x1]
    %v342 = vlaneseq
    %v343 = vshrl.u32 %v342, 7
    %v344 = vsub.s32 0, %v343
    %v345 = vrot.slane %v340, %v344
    %347 = vmatprep.subr.mxu0 0.0
    %348 = vmatpush1.msra.mxu0 %v323
    %349 = vmatprep.subr.mxu0 0.0
    %350 = vmatpush1.msra.mxu0 %v322
    %351 = vmatprep.subr.mxu0 0.0
    %352 = vmatpush1.msra.mxu0 %v321
    %353 = vmatprep.subr.mxu0 0.0
    %354 = vmatpush1.msra.mxu0 %v320
    %355 = vmatprep.subr.mxu0 0.0
    %356 = vmatpush1.msra.mxu0 %v319
    %357 = vmatprep.subr.mxu0 0.0
    %358 = vmatpush1.msra.mxu0 %v318
    %359 = vmatprep.subr.mxu0 0.0
    %360 = vmatpush1.msra.mxu0 %v317
    %361 = vmatprep.subr.mxu0 0.0
    %362 = vmatpush1.msra.mxu0 %v316
    %363 = vmatprep.subr.mxu0 0.0
    %364 = vmatpush1.msra.mxu0 %v315
    %365 = vmatprep.subr.mxu0 0.0
    %366 = vmatpush1.msra.mxu0 %v314
    %367 = vmatprep.subr.mxu0 0.0
    %368 = vmatpush1.msra.mxu0 %v313
    %369 = vmatprep.subr.mxu0 0.0
    %370 = vmatpush1.msra.mxu0 %v312
    %371 = vmatprep.subr.mxu0 0.0
    %372 = vmatpush1.msra.mxu0 %v311
    %373 = vmatprep.subr.mxu0 0.0
    %374 = vmatpush1.msra.mxu0 %v310
    %375 = vmatprep.subr.mxu0 0.0
    %376 = vmatpush1.msra.mxu0 %v309
    %377 = vmatprep.subr.mxu0 0.0
    %378 = vmatpush1.msra.mxu0 %v308
    %379 = vmatprep.subr.mxu0 0.0
    %380 = vmatpush2.msra.mxu0 %v339
    %381 = vmatprep.subr.mxu0 0.0
    %382 = vmatpush2.msra.mxu0 %v338
    %383 = vmatprep.subr.mxu0 0.0
    %384 = vmatpush2.msra.mxu0 %v337
    %385 = vmatprep.subr.mxu0 0.0
    %386 = vmatpush2.msra.mxu0 %v336
    %387 = vmatprep.subr.mxu0 0.0
    %388 = vmatpush2.msra.mxu0 %v335
    %389 = vmatprep.subr.mxu0 0.0
    %390 = vmatpush2.msra.mxu0 %v334
    %391 = vmatprep.subr.mxu0 0.0
    %392 = vmatpush2.msra.mxu0 %v333
    %393 = vmatprep.subr.mxu0 0.0
    %394 = vmatpush2.msra.mxu0 %v332
    %395 = vmatprep.subr.mxu0 0.0
    %396 = vmatpush2.msra.mxu0 %v331
    %397 = vmatprep.subr.mxu0 0.0
    %398 = vmatpush2.msra.mxu0 %v330
    %399 = vmatprep.subr.mxu0 0.0
    %400 = vmatpush2.msra.mxu0 %v329
    %401 = vmatprep.subr.mxu0 0.0
    %402 = vmatpush2.msra.mxu0 %v328
    %403 = vmatprep.subr.mxu0 0.0
    %404 = vmatpush2.msra.mxu0 %v327
    %405 = vmatprep.subr.mxu0 0.0
    %406 = vmatpush2.msra.mxu0 %v326
    %407 = vmatprep.subr.mxu0 0.0
    %408 = vmatpush2.msra.mxu0 %v325
    %409 = vmatprep.subr.mxu0 0.0
    %410 = vmatpush2.msra.mxu0 %v324
    %411 = vmatprep.mubr.f32.mxu0 %v307
    %412 = vmatmul.mubr.f32.gmra.mxu0 %v306
    %v413 = vpop.f32.mrf.mxu0
    %v414 = vadd.f32 %v345, %v413
    %v415 = vpop.f32.mrf.mxu0
    %416 = vdwg.mxu0
    %vm417 = vcmask 130048
    %418 = vst.msk [vmem:[#allocation5] sm:$0xff] %vm417, %v414
    // Predicated region
    $region34: #{tpu_custom_call.1} parent=1 // pred_check
      _
    $region35: #{tpu_custom_call.1} parent=1 // pred_check_branch
      %420 = sbr.rel (0) target = $region37
    $region36: #{tpu_custom_call.1} parent=1 // pred_region
      %s422 = ssub.s32 128, 128
      %423 = vsyncadd [#allocation4], %s422
      %s425 = sshll.u32 [#allocation5], 4
      %s426 = int_to_ptr.vmem [resolvable:$true] %s425
      %428 = dma.vmem_to_hbm [thread:$0]  %s426, 128, %s7, [#allocation4]
    $region37: #{tpu_custom_call.1} parent=1 // pred_fallthru
      _
    // Predicated region
    $region38: #{tpu_custom_call.1} parent=1 // pred_check
      _
    $region39: #{tpu_custom_call.1} parent=1 // pred_check_branch
      %430 = sbr.rel (0) target = $region41
    $region40: #{tpu_custom_call.1} parent=1 // pred_region
      %431 = dma.done [#allocation4], 128
    $region41: #{tpu_custom_call.1} parent=1 // pred_fallthru
      _
    %432 = vsyncpa [#allocation3], 1
    %433 = vsyncpa [#allocation4], 1

</llo_original>
